<compile_context>
chip_gen: v7x
topology: tpu7x:2x2x1
jax: 0.10.0
libtpu: 0.0.40
codegen_flags: <defaults>
</compile_context>

<pallas_src>
import jax
import jax.numpy as jnp
from jax import lax
from jax.experimental import pallas as pl
from jax.experimental.pallas import tpu as pltpu


def _cdiv(a: int, b: int) -> int:
    return -(-a // b)


def _round_up(x: int, m: int) -> int:
    return _cdiv(x, m) * m


def _vmem_capacity_bytes() -> int:
    try:
        info = pltpu.get_tpu_info()
        cap = int(getattr(info, "vmem_capacity_bytes", 0))
        if cap > 0:
            return cap
    except Exception:
        pass
    return 64 * 1024 * 1024  # v7x floor: a safe assumption on every generation


def _plan_blocks(bg, n_pad, hidden, a_pad, x_itemsize, mask_itemsize):
    """Pick (TB bags/step, CB bags/compute-chunk, num_blocks, vmem_limit)."""
    vmem_cap = _vmem_capacity_bytes()
    # Raise the scoped VMEM limit (defaults: 16/32 MiB) toward ~75% of
    # physical (v5e/v6e ~96 MiB, v7x ~48 MiB); budget explicit blocks at ~70%
    # of that, leaving headroom for Mosaic internal scratch and f32 temps.
    vmem_limit = (vmem_cap * 3) // 4
    block_budget = (vmem_limit * 7) // 10

    # Compute-chunk CB: bound the live f32 z slab (CB*Np*2*Apad*4 B) to ~1 MiB.
    z_bytes_per_bag = n_pad * 2 * a_pad * 4
    cb = max(1, min(256, (1 << 20) // max(1, z_bytes_per_bag)))
    cb = 1 << (cb.bit_length() - 1)          # power of two -> divides any quantum
    cb = min(cb, _round_up(bg, 8))

    # DMA-block TB: as many bags as the budget allows; target ~8 MiB x blocks.
    per_bag = n_pad * (2 * hidden * x_itemsize   # x block, double-buffered
                       + 2 * mask_itemsize       # mask block, double-buffered
                       + 2 * 4                   # f32 out block, double-buffered
                       + 4)                      # f32 logits scratch
    fixed = hidden * 2 * a_pad * x_itemsize + (3 * a_pad + 1) * 4 + 4096
    cap_bags = max(1, (block_budget - fixed) // per_bag)
    target_bags = max(1, (8 << 20) // max(1, n_pad * hidden * x_itemsize))
    bg8 = _round_up(bg, 8)
    tb = min(cap_bags, target_bags, bg8)

    if tb >= bg8:
        # Whole (padded) batch in a single grid step.
        tb = _round_up(bg8, cb)
        num_blocks = 1
    else:
        # TB must be a multiple of CB (chunk loop) and of 16 (bf16 mask
        # sublane tiling when the mask block is not the full array); prefer an
        # even block count so both TensorCores / megacore halves stay busy.
        quantum = max(cb, 16)
        tb = max(quantum, (tb // quantum) * quantum)
        num_blocks = _cdiv(bg, tb)
        if num_blocks > 1 and num_blocks % 2 == 1:
            tb = max(quantum, _round_up(_cdiv(bg, num_blocks + 1), quantum))
            num_blocks = _cdiv(bg, tb)
    return tb, cb, num_blocks, int(vmem_limit)


def _make_kernel(TB, Np, H, A, Apad, CB, n_valid):
    num_chunks = TB // CB

    def kernel(x_ref, m_ref, w_ref, b_ref, ww_ref, bw_ref, o_ref, logit_ref):
        # x_ref:  (TB, Np, H)   input dtype (bf16/f32) — dominant HBM stream
        # m_ref:  (TB, Np)      bf16 mask, 1 = valid instance
        # w_ref:  (H, 2*Apad)   [Wv | 0 | Wu | 0], U half lane-aligned at Apad
        # b_ref:  (1, 2*Apad)   fused bias (f32)
        # ww_ref: (1, A)        attention_weights row (f32)
        # bw_ref: (1, 1)        attention_weights bias, SMEM scalar
        # o_ref:  (1, Np, TB)   transposed softmax output (bags on lanes)
        # logit_ref: (TB, Np)   f32 VMEM scratch for the per-bag logits
        bw = bw_ref[0, 0]

        def chunk(c, carry):
            r0 = pl.multiple_of(c * CB, CB)
            xc = x_ref[pl.ds(r0, CB)]                       # (CB, Np, H)
            z = jnp.dot(xc.reshape(CB * Np, H), w_ref[...],
                        preferred_element_type=jnp.float32)
            z = z + b_ref[...]
            v = jnp.tanh(z[:, :A])                          # lane-aligned slice
            u = jax.nn.sigmoid(z[:, Apad:Apad + A])         # lane-aligned slice
            g = (v * u).reshape(CB, Np, A)
            # Width-1 projection as VPU multiply + lane reduce (MXU stays free).
            logit_ref[pl.ds(r0, CB), :] = (
                jnp.sum(g * ww_ref[...], axis=-1) + bw)     # (CB, Np) f32
            return carry

        # Chunked compute: bounds the live f32 z/gated slab independently of
        # the (large) DMA block.  Short trip counts are unrolled for the LLO
        # scheduler; long ones stay rolled to keep code size sane.
        lax.fori_loop(0, num_chunks, chunk, 0, unroll=num_chunks <= 8)

        logits = logit_ref[...]                             # (TB, Np) f32
        if Np != n_valid:
            # Padded instance columns get -inf so fully-masked bags still
            # normalize to 1/N over the real instances (matches the reference).
            col = lax.broadcasted_iota(jnp.int32, (TB, Np), 1)
            fill = jnp.where(col < n_valid, jnp.float32(-1e25),
                             jnp.float32(-jnp.inf))
        else:
            fill = jnp.float32(-1e25)
        logits = jnp.where(m_ref[...] > 0, logits, fill)

        # Softmax over the instance axis (PyTorch dim=2), fully in f32,
        # exact normalization (the divide is free on a mem-bound kernel).
        mx = jnp.max(logits, axis=-1, keepdims=True)        # (TB, 1)
        e = jnp.exp(logits - mx)
        s = jnp.sum(e, axis=-1, keepdims=True)
        probs = e / s                                       # (TB, Np)

        # Store transposed: bags land on the lane axis -> lane-dense stores
        # whenever TB >= 128 (small-N MIL bags would otherwise hit masked vst).
        o_ref[...] = probs.T[None, :, :]                    # (1, Np, TB)

    return kernel


def gated_mil_attention(x, masks, wv, bv, wu, bu, ww, bw):
    """x: [B, G, N, H]; masks: [B, G, N] (bool / 0-1).
    Returns attention weights [B, G, N, 1] float32."""
    B, G, N, H = x.shape
    A = wv.shape[1]
    BG = B * G
    dtype = x.dtype
    x_item = jnp.dtype(dtype).itemsize

    Np = _round_up(N, 8)                 # sublane-aligned instance count
    Apad = _round_up(A, 128)             # lane-aligned offset of the U half

    TB, CB, num_blocks, vmem_limit = _plan_blocks(BG, Np, H, Apad, x_item, 2)
    BG_pad = num_blocks * TB

    # x keeps its dtype (bf16 halves the dominant HBM stream); mask is bf16.
    x_f = x.reshape(BG, N, H)
    m_f = masks.reshape(BG, N).astype(jnp.bfloat16)
    if BG_pad != BG or Np != N:
        x_f = jnp.pad(x_f, ((0, BG_pad - BG), (0, Np - N), (0, 0)))
        m_f = jnp.pad(m_f, ((0, BG_pad - BG), (0, Np - N)))  # padding masked out

    # Fused gate weights: V half at lanes [0, A), U half at lanes
    # [Apad, Apad+A); everything else zero.  (In a real model build these once
    # outside the hot path.)
    w_fused = jnp.zeros((H, 2 * Apad), dtype=dtype)
    w_fused = w_fused.at[:, :A].set(wv.astype(dtype))
    w_fused = w_fused.at[:, Apad:Apad + A].set(wu.astype(dtype))
    b_fused = jnp.zeros((1, 2 * Apad), dtype=jnp.float32)
    b_fused = b_fused.at[0, :A].set(bv.astype(jnp.float32))
    b_fused = b_fused.at[0, Apad:Apad + A].set(bu.astype(jnp.float32))
    ww_row = ww.reshape(1, A).astype(jnp.float32)
    bw_s = bw.reshape(1, 1).astype(jnp.float32)

    cost = pl.CostEstimate(
        flops=int(2 * BG_pad * Np * H * 2 * Apad
                  + 4 * BG_pad * Np * A + 5 * BG_pad * Np),
        transcendentals=int(BG_pad * Np * (2 * A + 1)),
        bytes_accessed=int(BG_pad * Np * (H * x_item + 2 + 4)
                           + H * 2 * Apad * x_item + (3 * Apad + 1) * 4),
    )

    kernel = _make_kernel(TB, Np, H, A, Apad, CB, N)
    const2 = lambda i: (0, 0)

    out = pl.pallas_call(
        kernel,
        out_shape=jax.ShapeDtypeStruct((num_blocks, Np, TB), jnp.float32),
        grid_spec=pltpu.PrefetchScalarGridSpec(
            num_scalar_prefetch=0,
            grid=(num_blocks,),
            in_specs=[
                pl.BlockSpec((TB, Np, H), lambda i: (i, 0, 0)),          # x
                pl.BlockSpec((TB, Np), lambda i: (i, 0)),                # mask
                pl.BlockSpec((H, 2 * Apad), const2),                     # Wv|Wu
                pl.BlockSpec((1, 2 * Apad), const2),                     # bv|bu
                pl.BlockSpec((1, A), const2),                            # Ww row
                pl.BlockSpec(memory_space=pltpu.MemorySpace.SMEM),       # bw
            ],
            out_specs=pl.BlockSpec((1, Np, TB), lambda i: (i, 0, 0)),
            scratch_shapes=[pltpu.VMEM((TB, Np), jnp.float32)],          # logits
        ),
        compiler_params=pltpu.CompilerParams(
            dimension_semantics=("parallel",),
            vmem_limit_bytes=vmem_limit,
        ),
        cost_estimate=cost,
    )(x_f, m_f, w_fused, b_fused, ww_row, bw_s)

    # (num_blocks, Np, TB) -> (BG_pad, Np): only the small output stream is
    # transposed in HBM (never x), then padded bags / instances are dropped.
    out = out.transpose(0, 2, 1).reshape(BG_pad, Np)
    return out[:BG, :N].reshape(B, G, N, 1)


def _reference(x, masks, wv, bv, wu, bu, ww, bw):
    # Pure-JAX reference mirroring the PyTorch module.
    v = jnp.tanh(x @ wv + bv)
    u = jax.nn.sigmoid(x @ wu + bu)
    a = (v * u) @ ww.reshape(-1, 1) + bw
    a = jnp.where(masks[..., None] > 0, a, -1e25)
    return jax.nn.softmax(a, axis=2)


if __name__ == "__main__":
    key = jax.random.PRNGKey(0)
    B, G, N, H, A = 2, 4, 8, 32, 16
    k_x, k_m, k_wv, k_bv, k_wu, k_bu, k_ww, k_bw = jax.random.split(key, 8)

    x = jax.random.normal(k_x, (B, G, N, H), dtype=jnp.float32)
    masks = (jax.random.uniform(k_m, (B, G, N)) > 0.3).astype(jnp.float32)
    masks = masks.at[:, :, 0].set(1.0)   # every bag has >= 1 valid instance

    # Parameters in (in, out) layout (transpose of torch Linear weights).
    wv = jax.random.normal(k_wv, (H, A), dtype=jnp.float32) * 0.1
    bv = jax.random.normal(k_bv, (A,), dtype=jnp.float32) * 0.1
    wu = jax.random.normal(k_wu, (H, A), dtype=jnp.float32) * 0.1
    bu = jax.random.normal(k_bu, (A,), dtype=jnp.float32) * 0.1
    ww = jax.random.normal(k_ww, (A,), dtype=jnp.float32) * 0.1
    bw = jax.random.normal(k_bw, (1,), dtype=jnp.float32) * 0.1

    out = gated_mil_attention(x, masks, wv, bv, wu, bu, ww, bw)
    out = jax.block_until_ready(out)
    ref = _reference(x, masks, wv, bv, wu, bu, ww, bw)
    if not jnp.allclose(out, ref, atol=2e-3, rtol=0.0):
        raise AssertionError("Pallas kernel output mismatch vs reference (test 1)")

    # Second check: ragged instance count (N not a multiple of 8), bag padding
    # and a fully-masked bag — exercises the instance-padding / -inf fill path.
    B2, G2, N2 = 1, 2, 5
    x2 = jax.random.normal(jax.random.PRNGKey(1), (B2, G2, N2, H),
                           dtype=jnp.float32)
    masks2 = jnp.ones((B2, G2, N2), dtype=jnp.float32)
    masks2 = masks2.at[0, 0, 3:].set(0.0)   # partially masked bag
    masks2 = masks2.at[0, 1].set(0.0)       # fully masked bag -> uniform 1/N
    out2 = gated_mil_attention(x2, masks2, wv, bv, wu, bu, ww, bw)
    out2 = jax.block_until_ready(out2)
    ref2 = _reference(x2, masks2, wv, bv, wu, bu, ww, bw)
    if not jnp.allclose(out2, ref2, atol=2e-3, rtol=0.0):
        raise AssertionError("Pallas kernel output mismatch vs reference (test 2)")

    print("KERNEL_OK")
</pallas_src>

<mosaic_0001>
module attributes {stable_mosaic.version = 11 : i64} {
  func.func @kernel(%arg0: i32, %arg1: memref<8x8x32xf32, #tpu.memory_space<vmem>>, %arg2: memref<8x8xbf16, #tpu.memory_space<vmem>>, %arg3: memref<32x256xf32, #tpu.memory_space<vmem>>, %arg4: memref<1x256xf32, #tpu.memory_space<vmem>>, %arg5: memref<1x16xf32, #tpu.memory_space<vmem>>, %arg6: memref<1x1xf32, #tpu.memory_space<smem>>, %arg7: memref<1x8x8xf32, #tpu.memory_space<vmem>>, %arg8: memref<8x8xf32, #tpu.memory_space<vmem>>) attributes {dimension_semantics = [#tpu.dimension_semantics<parallel>], iteration_bounds = array<i64: 1>, scalar_prefetch = 0 : i64, scratch_operands = 1 : i64, tpu.core_type = #tpu.core_type<tc>, window_params = [{transform_indices = @transform_0, window_bounds = array<i64: 8, 8, 32>}, {transform_indices = @transform_1, window_bounds = array<i64: 8, 8>}, {pipeline_mode = #tpu.pipeline_mode<synchronous>, transform_indices = @transform_2, window_bounds = array<i64: 32, 256>}, {pipeline_mode = #tpu.pipeline_mode<synchronous>, transform_indices = @transform_3, window_bounds = array<i64: 1, 256>}, {pipeline_mode = #tpu.pipeline_mode<synchronous>, transform_indices = @transform_4, window_bounds = array<i64: 1, 16>}, {transform_indices = @transform_5, window_bounds = array<i64: 1, 1>}, {transform_indices = @transform_6, window_bounds = array<i64: 1, 8, 8>}]} {
    %c0 = arith.constant 0 : index
    %c0_0 = arith.constant 0 : index
    %0 = memref.load %arg6[%c0, %c0_0] : memref<1x1xf32, #tpu.memory_space<smem>>
    %c0_i32 = arith.constant 0 : i32
    %c8_i32 = arith.constant 8 : i32
    %1 = arith.muli %c0_i32, %c8_i32 : i32
    %2 = tpu.assume_multiple %1, 8 : i32
    %3 = arith.index_cast %2 : i32 to index
    %c0_1 = arith.constant 0 : index
    %c0_2 = arith.constant 0 : index
    %4 = vector.load %arg1[%3, %c0_1, %c0_2] : memref<8x8x32xf32, #tpu.memory_space<vmem>>, vector<8x8x32xf32>
    %5 = vector.shape_cast %4 : vector<8x8x32xf32> to vector<64x32xf32>
    %c0_3 = arith.constant 0 : index
    %c0_4 = arith.constant 0 : index
    %6 = vector.load %arg3[%c0_3, %c0_4] : memref<32x256xf32, #tpu.memory_space<vmem>>, vector<32x256xf32>
    %cst = arith.constant dense<0.000000e+00> : vector<64x256xf32>
    %7 = tpu.matmul %5, %6, %cst {dimension_numbers = #tpu.dot_dimension_numbers<[1], [0], [0], [1], [0, 0, 1, 1], [], []>} : vector<64x32xf32>, vector<32x256xf32>, vector<64x256xf32> -> vector<64x256xf32>
    %c0_5 = arith.constant 0 : index
    %c0_6 = arith.constant 0 : index
    %8 = vector.load %arg4[%c0_5, %c0_6] : memref<1x256xf32, #tpu.memory_space<vmem>>, vector<1x256xf32>
    %9 = vector.broadcast %8 : vector<1x256xf32> to vector<64x256xf32>
    %10 = arith.addf %7, %9 : vector<64x256xf32>
    %11 = vector.extract_strided_slice %10 {offsets = [0, 0], sizes = [64, 16], strides = [1, 1]} : vector<64x256xf32> to vector<64x16xf32>
    %12 = math.tanh %11 : vector<64x16xf32>
    %13 = vector.extract_strided_slice %10 {offsets = [0, 128], sizes = [64, 16], strides = [1, 1]} : vector<64x256xf32> to vector<64x16xf32>
    %14 = arith.negf %13 : vector<64x16xf32>
    %15 = math.exp %14 : vector<64x16xf32>
    %cst_7 = arith.constant 1.000000e+00 : f32
    %16 = vector.broadcast %cst_7 : f32 to vector<64x16xf32>
    %17 = arith.addf %16, %15 : vector<64x16xf32>
    %18 = arith.divf %16, %17 : vector<64x16xf32>
    %19 = arith.mulf %12, %18 : vector<64x16xf32>
    %20 = vector.shape_cast %19 : vector<64x16xf32> to vector<8x8x16xf32>
    %c0_8 = arith.constant 0 : index
    %c0_9 = arith.constant 0 : index
    %21 = vector.load %arg5[%c0_8, %c0_9] : memref<1x16xf32, #tpu.memory_space<vmem>>, vector<1x16xf32>
    %22 = vector.shape_cast %21 : vector<1x16xf32> to vector<1x1x16xf32>
    %23 = vector.broadcast %22 : vector<1x1x16xf32> to vector<8x8x16xf32>
    %24 = arith.mulf %20, %23 : vector<8x8x16xf32>
    %cst_10 = arith.constant dense<0.000000e+00> : vector<8x8xf32>
    %25 = vector.multi_reduction <add>, %24, %cst_10 [2] : vector<8x8x16xf32> to vector<8x8xf32>
    %26 = vector.broadcast %0 : f32 to vector<8x8xf32>
    %27 = arith.addf %25, %26 : vector<8x8xf32>
    %28 = arith.index_cast %2 : i32 to index
    %c0_11 = arith.constant 0 : index
    %29 = vector.load %arg8[%28, %c0_11] : memref<8x8xf32, #tpu.memory_space<vmem>>, vector<8x8xf32>
    tpu.vector_store %arg8[%28, %c0_11], %27 {strides = array<i32>} : memref<8x8xf32, #tpu.memory_space<vmem>>, vector<8x8xf32>,
    %c1_i32 = arith.constant 1 : i32
    %c0_12 = arith.constant 0 : index
    %c0_13 = arith.constant 0 : index
    %30 = vector.load %arg8[%c0_12, %c0_13] : memref<8x8xf32, #tpu.memory_space<vmem>>, vector<8x8xf32>
    %c0_14 = arith.constant 0 : index
    %c0_15 = arith.constant 0 : index
    %31 = vector.load %arg2[%c0_14, %c0_15] : memref<8x8xbf16, #tpu.memory_space<vmem>>, vector<8x8xbf16>
    %cst_16 = arith.constant 0.000000e+00 : bf16
    %32 = vector.broadcast %cst_16 : bf16 to vector<8x8xbf16>
    %33 = arith.cmpf ogt, %31, %32 : vector<8x8xbf16>
    %cst_17 = arith.constant -9.99999956E+24 : f32
    %34 = vector.broadcast %cst_17 : f32 to vector<8x8xf32>
    %35 = arith.select %33, %30, %34 : vector<8x8xi1>, vector<8x8xf32>
    %cst_18 = arith.constant dense<0xFF800000> : vector<8xf32>
    %36 = vector.multi_reduction <maximumf>, %35, %cst_18 [1] : vector<8x8xf32> to vector<8xf32>
    %37 = vector.shape_cast %36 : vector<8xf32> to vector<8x1xf32>
    %38 = vector.broadcast %37 : vector<8x1xf32> to vector<8x8xf32>
    %39 = arith.subf %35, %38 : vector<8x8xf32>
    %40 = math.exp %39 : vector<8x8xf32>
    %cst_19 = arith.constant dense<0.000000e+00> : vector<8xf32>
    %41 = vector.multi_reduction <add>, %40, %cst_19 [1] : vector<8x8xf32> to vector<8xf32>
    %42 = vector.shape_cast %41 : vector<8xf32> to vector<8x1xf32>
    %43 = vector.broadcast %42 : vector<8x1xf32> to vector<8x8xf32>
    %44 = arith.divf %40, %43 : vector<8x8xf32>
    %45 = tpu.transpose %44, [1, 0] : vector<8x8xf32> -> vector<8x8xf32>
    %46 = vector.shape_cast %45 : vector<8x8xf32> to vector<1x8x8xf32>
    %c0_20 = arith.constant 0 : index
    %c0_21 = arith.constant 0 : index
    %c0_22 = arith.constant 0 : index
    %47 = vector.load %arg7[%c0_20, %c0_21, %c0_22] : memref<1x8x8xf32, #tpu.memory_space<vmem>>, vector<1x8x8xf32>
    tpu.vector_store %arg7[%c0_20, %c0_21, %c0_22], %46 {strides = array<i32>} : memref<1x8x8xf32, #tpu.memory_space<vmem>>, vector<1x8x8xf32>,
    return
  }
  func.func @transform_0(%arg0: i32) -> (i32, i32, i32) {
    %c0_i32 = arith.constant 0 : i32
    %c0_i32_0 = arith.constant 0 : i32
    %c0_i32_1 = arith.constant 0 : i32
    return %arg0, %c0_i32, %c0_i32_0 : i32, i32, i32
  }
  func.func @transform_1(%arg0: i32) -> (i32, i32) {
    %c0_i32 = arith.constant 0 : i32
    %c0_i32_0 = arith.constant 0 : i32
    return %arg0, %c0_i32 : i32, i32
  }
  func.func @transform_2(%arg0: i32) -> (i32, i32) {
    %c0_i32 = arith.constant 0 : i32
    %c0_i32_0 = arith.constant 0 : i32
    %c0_i32_1 = arith.constant 0 : i32
    return %c0_i32, %c0_i32_0 : i32, i32
  }
  func.func @transform_3(%arg0: i32) -> (i32, i32) {
    %c0_i32 = arith.constant 0 : i32
    %c0_i32_0 = arith.constant 0 : i32
    %c0_i32_1 = arith.constant 0 : i32
    return %c0_i32, %c0_i32_0 : i32, i32
  }
  func.func @transform_4(%arg0: i32) -> (i32, i32) {
    %c0_i32 = arith.constant 0 : i32
    %c0_i32_0 = arith.constant 0 : i32
    %c0_i32_1 = arith.constant 0 : i32
    return %c0_i32, %c0_i32_0 : i32, i32
  }
  func.func @transform_5(%arg0: i32) -> (i32, i32) {
    %c0_i32 = arith.constant 0 : i32
    %c0_i32_0 = arith.constant 0 : i32
    %c0_i32_1 = arith.constant 0 : i32
    return %c0_i32, %c0_i32_0 : i32, i32
  }
  func.func @transform_6(%arg0: i32) -> (i32, i32, i32) {
    %c0_i32 = arith.constant 0 : i32
    %c0_i32_0 = arith.constant 0 : i32
    %c0_i32_1 = arith.constant 0 : i32
    return %arg0, %c0_i32, %c0_i32_0 : i32, i32, i32
  }
}

</mosaic_0001>

<llo_original>
// kernel: tpu_custom_call.1
$region0: #{tpu_custom_call.1}
  #allocation0 [shape = 'u32[]', space=smem, size = 0x4, offset = 0x4, fixed_abs, tag = 'smem constant byte address 0x4 - core index']
  #allocation1 [shape = 'u32[144,128]{1,0:T(1,128)}', space=vmem, size = 0x12000, scoped, tag = 'internal scratch']
  #allocation2 [shape = 'f32[8,8]{1,0:T(8,128)}', space=vmem, size = 0x1000, scoped, tag = 'scratch operand']
  #allocation3 [shape = 'f32[1,1]{1,0:T(1,128)S(6)}', space=smem, size = 0x200, scoped, tag = 'scoped memory for tpu_custom_call.1']
  %s0 = inlined_call_operand.hbm [shape: f32[8,8,32], index: 0, kind: input, shape index: {}]
  %s1 = inlined_call_operand.vmem [shape: bf16[8,8], index: 1, kind: input, shape index: {}]
  %s2 = inlined_call_operand.hbm [shape: f32[32,256], index: 2, kind: input, shape index: {}]
  %s3 = inlined_call_operand.vmem [shape: f32[1,256], index: 3, kind: input, shape index: {}]
  %s4 = inlined_call_operand.vmem [shape: f32[1,16], index: 4, kind: input, shape index: {}]
  %s5 = inlined_call_operand.<no memory space> [shape: f32[1,1], index: 5, kind: input, shape index: {}]
  %s6 = inlined_call_operand.hbm [shape: f32[1,8,8], index: 6, kind: output, shape index: {}]
  %s7 = sld [smem:[#allocation0]]
  $region42: #{tpu_custom_call.1} parent=0
    _
  %s9 = ssub.s32 1, %s7
  %s10 = scalar_select 0, %s9, %s7
  %11 = sst [smem:[#allocation3]] %s5
  $region1: #{tpu_custom_call.1} parent=0
    #allocation4 [shape = 'u8[32768]{0}', space=vmem, size = 0x8000, scoped, tag = 'input window, operand 0, single buffered']
    #allocation5 [shape = 's32[1]{0}', space=sflag, size = 0x4, scoped, tag = 'scoped memory for tpu_custom_call.1']
    #allocation6 [shape = 's32[1]{0}', space=sflag, size = 0x4, scoped, tag = 'scoped memory for tpu_custom_call.1']
    #allocation7 [shape = 'u8[32768]{0}', space=vmem, size = 0x8000, scoped, tag = 'input window, operand 2, single buffered']
    #allocation8 [shape = 's32[1]{0}', space=sflag, size = 0x4, scoped, tag = 'scoped memory for tpu_custom_call.1']
    #allocation9 [shape = 'u8[4096]{0}', space=vmem, size = 0x1000, scoped, tag = 'output window, operand 0, single buffered']
    %12 = vsyncpa [#allocation5], 0
    %13 = vsyncpa [#allocation8], 0
    %14 = vsyncpa [#allocation6], 0
    // Predicated region
    $region2: #{tpu_custom_call.1} parent=1 // pred_check
      _
    $region3: #{tpu_custom_call.1} parent=1 // pred_check_branch
      %16 = sbr.rel (0) target = $region5
    $region4: #{tpu_custom_call.1} parent=1 // pred_region
      %s18 = ssub.s32 1024, 1024
      %19 = vsyncadd [#allocation5], %s18
      %s20 = sshll.u32 [#allocation4], 4
      %s21 = int_to_ptr.vmem [resolvable:$true] %s20
      %26 = dma.hbm_to_vmem [thread:$0]  %s0, 1024, %s21, [#allocation5], 128, 128, 8
    $region5: #{tpu_custom_call.1} parent=1 // pred_fallthru
      _
    // Predicated region
    $region6: #{tpu_custom_call.1} parent=1 // pred_check
      _
    $region7: #{tpu_custom_call.1} parent=1 // pred_check_branch
      %28 = sbr.rel (0) target = $region9
    $region8: #{tpu_custom_call.1} parent=1 // pred_region
      _
    $region9: #{tpu_custom_call.1} parent=1 // pred_fallthru
      _
    // Predicated region
    $region10: #{tpu_custom_call.1} parent=1 // pred_check
      _
    $region11: #{tpu_custom_call.1} parent=1 // pred_check_branch
      %30 = sbr.rel (0) target = $region13
    $region12: #{tpu_custom_call.1} parent=1 // pred_region
      %s32 = ssub.s32 1024, 1024
      %33 = vsyncadd [#allocation8], %s32
      %s34 = sshll.u32 [#allocation7], 4
      %s35 = int_to_ptr.vmem [resolvable:$true] %s34
      %40 = dma.hbm_to_vmem [thread:$0]  %s2, 1024, %s35, [#allocation8], 256, 256, 16
    $region13: #{tpu_custom_call.1} parent=1 // pred_fallthru
      _
    // Predicated region
    $region14: #{tpu_custom_call.1} parent=1 // pred_check
      _
    $region15: #{tpu_custom_call.1} parent=1 // pred_check_branch
      %42 = sbr.rel (0) target = $region17
    $region16: #{tpu_custom_call.1} parent=1 // pred_region
      _
    $region17: #{tpu_custom_call.1} parent=1 // pred_fallthru
      _
    // Predicated region
    $region18: #{tpu_custom_call.1} parent=1 // pred_check
      _
    $region19: #{tpu_custom_call.1} parent=1 // pred_check_branch
      %44 = sbr.rel (0) target = $region21
    $region20: #{tpu_custom_call.1} parent=1 // pred_region
      _
    $region21: #{tpu_custom_call.1} parent=1 // pred_fallthru
      _
    // Predicated region
    $region22: #{tpu_custom_call.1} parent=1 // pred_check
      _
    $region23: #{tpu_custom_call.1} parent=1 // pred_check_branch
      %46 = sbr.rel (0) target = $region25
    $region24: #{tpu_custom_call.1} parent=1 // pred_region
      _
    $region25: #{tpu_custom_call.1} parent=1 // pred_fallthru
      _
    // Predicated region
    $region26: #{tpu_custom_call.1} parent=1 // pred_check
      _
    $region27: #{tpu_custom_call.1} parent=1 // pred_check_branch
      %48 = sbr.rel (0) target = $region29
    $region28: #{tpu_custom_call.1} parent=1 // pred_region
      %49 = dma.done [#allocation5], 1024
    $region29: #{tpu_custom_call.1} parent=1 // pred_fallthru
      _
    // Predicated region
    $region30: #{tpu_custom_call.1} parent=1 // pred_check
      _
    $region31: #{tpu_custom_call.1} parent=1 // pred_check_branch
      %51 = sbr.rel (0) target = $region33
    $region32: #{tpu_custom_call.1} parent=1 // pred_region
      %52 = dma.done [#allocation8], 1024
    $region33: #{tpu_custom_call.1} parent=1 // pred_fallthru
      _
    %s56 = sld [smem:[#allocation3]]
    %s57 = smul.u32 0, 8
    %s58 = scalar_lea.vmem [#allocation4], %s57
    %v59 = vld [vmem:[%s58] sm:$0xff]
    %v60 = vld [vmem:[%s58 + $0x8] sm:$0xff]
    %v61 = vld [vmem:[%s58 + $0x10] sm:$0xff]
    %v62 = vld [vmem:[%s58 + $0x18] sm:$0xff]
    %v63 = vld [vmem:[%s58 + $0x20] sm:$0xff]
    %v64 = vld [vmem:[%s58 + $0x28] sm:$0xff]
    %v65 = vld [vmem:[%s58 + $0x30] sm:$0xff]
    %v66 = vld [vmem:[%s58 + $0x38] sm:$0xff]
    %v67 = vld [vmem:[#allocation7] sm:$0xff]
    %v68 = vld [vmem:[#allocation7 + $0x8] sm:$0xff]
    %v69 = vld [vmem:[#allocation7 + $0x10] sm:$0xff]
    %v70 = vld [vmem:[#allocation7 + $0x18] sm:$0xff]
    %v71 = vld [vmem:[#allocation7 + $0x20] sm:$0xff]
    %v72 = vld [vmem:[#allocation7 + $0x28] sm:$0xff]
    %v73 = vld [vmem:[#allocation7 + $0x30] sm:$0xff]
    %v74 = vld [vmem:[#allocation7 + $0x38] sm:$0xff]
    %v75 = vld [vmem:[%s3] sm:$0x3]
    %v77 = vlaneseq
    %v78 = vshrl.u32 %v77, 7
    %v79 = vsub.s32 0, %v78
    %v80 = vrot.slane %v75, %v79
    %v81 = vlaneseq
    %v82 = vshrl.u32 %v81, 7
    %v83 = vsub.s32 1, %v82
    %v84 = vrot.slane %v75, %v83
    %vm87 = vcmask 261120
    %v89 = vsel %vm87, %v59, 0
    %v92 = vsel %vm87, %v60, 0
    %v95 = vsel %vm87, %v61, 0
    %v98 = vsel %vm87, %v62, 0
    %v101 = vsel %vm87, %v63, 0
    %v104 = vsel %vm87, %v64, 0
    %v107 = vsel %vm87, %v65, 0
    %v110 = vsel %vm87, %v66, 0
    %112 = vmatprep.subr.mxu0 %v68
    %113 = vmatpush1.msra.mxu0 %v67
    %114 = vmatprep.subr.mxu0 %v70
    %115 = vmatpush1.msra.mxu0 %v69
    %116 = vmatprep.subr.mxu0 %v72
    %117 = vmatpush1.msra.mxu0 %v71
    %118 = vmatprep.subr.mxu0 %v74
    %119 = vmatpush1.msra.mxu0 %v73
    %120 = vmatprep.subr.mxu0 0.0
    %121 = vmatpush1.msra.mxu0 0.0
    %122 = vmatprep.subr.mxu0 0.0
    %123 = vmatpush1.msra.mxu0 0.0
    %124 = vmatprep.subr.mxu0 0.0
    %125 = vmatpush1.msra.mxu0 0.0
    %126 = vmatprep.subr.mxu0 0.0
    %127 = vmatpush1.msra.mxu0 0.0
    %128 = vmatprep.subr.mxu0 0.0
    %129 = vmatpush1.msra.mxu0 0.0
    %130 = vmatprep.subr.mxu0 0.0
    %131 = vmatpush1.msra.mxu0 0.0
    %132 = vmatprep.subr.mxu0 0.0
    %133 = vmatpush1.msra.mxu0 0.0
    %134 = vmatprep.subr.mxu0 0.0
    %135 = vmatpush1.msra.mxu0 0.0
    %136 = vmatprep.subr.mxu0 0.0
    %137 = vmatpush1.msra.mxu0 0.0
    %138 = vmatprep.subr.mxu0 0.0
    %139 = vmatpush1.msra.mxu0 0.0
    %140 = vmatprep.subr.mxu0 0.0
    %141 = vmatpush1.msra.mxu0 0.0
    %142 = vmatprep.subr.mxu0 0.0
    %143 = vmatpush1.msra.mxu0 0.0
    %144 = vmatprep.subr.mxu0 0.0
    %145 = vmatpush1.msra.mxu0 0.0
    %146 = vmatprep.subr.mxu0 0.0
    %147 = vmatpush1.msra.mxu0 0.0
    %148 = vmatprep.subr.mxu0 0.0
    %149 = vmatpush1.msra.mxu0 0.0
    %150 = vmatprep.subr.mxu0 0.0
    %151 = vmatpush1.msra.mxu0 0.0
    %152 = vmatprep.subr.mxu0 0.0
    %153 = vmatpush1.msra.mxu0 0.0
    %154 = vmatprep.subr.mxu0 0.0
    %155 = vmatpush1.msra.mxu0 0.0
    %156 = vmatprep.subr.mxu0 0.0
    %157 = vmatpush1.msra.mxu0 0.0
    %158 = vmatprep.subr.mxu0 0.0
    %159 = vmatpush1.msra.mxu0 0.0
    %160 = vmatprep.subr.mxu0 0.0
    %161 = vmatpush1.msra.mxu0 0.0
    %162 = vmatprep.subr.mxu0 0.0
    %163 = vmatpush1.msra.mxu0 0.0
    %164 = vmatprep.subr.mxu0 0.0
    %165 = vmatpush1.msra.mxu0 0.0
    %166 = vmatprep.subr.mxu0 0.0
    %167 = vmatpush1.msra.mxu0 0.0
    %168 = vmatprep.subr.mxu0 0.0
    %169 = vmatpush1.msra.mxu0 0.0
    %170 = vmatprep.subr.mxu0 0.0
    %171 = vmatpush1.msra.mxu0 0.0
    %172 = vmatprep.subr.mxu0 0.0
    %173 = vmatpush1.msra.mxu0 0.0
    %174 = vmatprep.subr.mxu0 0.0
    %175 = vmatpush1.msra.mxu0 0.0
    %176 = vmatprep.mubr.f32.mxu0 0.0
    %177 = vmatmul.mubr.f32.gmra.mrb[0].mxu0 %v89
    %v178 = vpop.f32.mrb[0].mxu0
    %v179 = vadd.f32 %v80, %v178
    %v180 = vpop.f32.mrb[0].mxu0
    %v181 = vadd.f32 %v84, %v180
    %182 = vmatprep.mubr.f32.mxu0 0.0
    %183 = vmatmul.mubr.f32.gmra.mrb[0].mxu0 %v92
    %v184 = vpop.f32.mrb[0].mxu0
    %v185 = vadd.f32 %v80, %v184
    %v186 = vpop.f32.mrb[0].mxu0
    %v187 = vadd.f32 %v84, %v186
    %188 = vmatprep.mubr.f32.mxu0 0.0
    %189 = vmatmul.mubr.f32.gmra.mrb[0].mxu0 %v95
    %v190 = vpop.f32.mrb[0].mxu0
    %v191 = vadd.f32 %v80, %v190
    %v192 = vpop.f32.mrb[0].mxu0
    %v193 = vadd.f32 %v84, %v192
    %194 = vmatprep.mubr.f32.mxu0 0.0
    %195 = vmatmul.mubr.f32.gmra.mrb[0].mxu0 %v98
    %v196 = vpop.f32.mrb[0].mxu0
    %v197 = vadd.f32 %v80, %v196
    %v198 = vpop.f32.mrb[0].mxu0
    %v199 = vadd.f32 %v84, %v198
    %200 = vmatprep.mubr.f32.mxu0 0.0
    %201 = vmatmul.mubr.f32.gmra.mrb[0].mxu0 %v101
    %v202 = vpop.f32.mrb[0].mxu0
    %v203 = vadd.f32 %v80, %v202
    %v204 = vpop.f32.mrb[0].mxu0
    %v205 = vadd.f32 %v84, %v204
    %206 = vmatprep.mubr.f32.mxu0 0.0
    %207 = vmatmul.mubr.f32.gmra.mrb[0].mxu0 %v104
    %v208 = vpop.f32.mrb[0].mxu0
    %v209 = vadd.f32 %v80, %v208
    %v210 = vpop.f32.mrb[0].mxu0
    %v211 = vadd.f32 %v84, %v210
    %212 = vmatprep.mubr.f32.mxu0 0.0
    %213 = vmatmul.mubr.f32.gmra.mrb[0].mxu0 %v107
    %v214 = vpop.f32.mrb[0].mxu0
    %v215 = vadd.f32 %v80, %v214
    %v216 = vpop.f32.mrb[0].mxu0
    %v217 = vadd.f32 %v84, %v216
    %218 = vmatprep.mubr.f32.mxu0 0.0
    %219 = vmatmul.mubr.f32.gmra.mrb[0].mxu0 %v110
    %v220 = vpop.f32.mrb[0].mxu0
    %v221 = vadd.f32 %v80, %v220
    %v222 = vpop.f32.mrb[0].mxu0
    %v223 = vadd.f32 %v84, %v222
    %224 = vdwg.mxu0
    %v225 = vtanh.pop %v179
    %v226 = vtanh.pop %v185
    %v227 = vtanh.pop %v191
    %v228 = vtanh.pop %v197
    %v229 = vtanh.pop %v203
    %v230 = vtanh.pop %v209
    %v231 = vtanh.pop %v215
    %v232 = vtanh.pop %v221
    %v233 = vxor.u32 %v181, 2147483648
    %v234 = vxor.u32 %v187, 2147483648
    %v235 = vxor.u32 %v193, 2147483648
    %v236 = vxor.u32 %v199, 2147483648
    %v237 = vxor.u32 %v205, 2147483648
    %v238 = vxor.u32 %v211, 2147483648
    %v239 = vxor.u32 %v217, 2147483648
    %v240 = vxor.u32 %v223, 2147483648
    %v241 = vmul.f32 %v233, 1.442695
    %v242 = vpow.pop %v241
    %v243 = vmul.f32 %v234, 1.442695
    %v244 = vpow.pop %v243
    %v245 = vmul.f32 %v235, 1.442695
    %v246 = vpow.pop %v245
    %v247 = vmul.f32 %v236, 1.442695
    %v248 = vpow.pop %v247
    %v249 = vmul.f32 %v237, 1.442695
    %v250 = vpow.pop %v249
    %v251 = vmul.f32 %v238, 1.442695
    %v252 = vpow.pop %v251
    %v253 = vmul.f32 %v239, 1.442695
    %v254 = vpow.pop %v253
    %v255 = vmul.f32 %v240, 1.442695
    %v256 = vpow.pop %v255
    %v257 = vadd.f32 %v242, 1.0
    %v258 = vadd.f32 %v244, 1.0
    %v259 = vadd.f32 %v246, 1.0
    %v260 = vadd.f32 %v248, 1.0
    %v261 = vadd.f32 %v250, 1.0
    %v262 = vadd.f32 %v252, 1.0
    %v263 = vadd.f32 %v254, 1.0
    %v264 = vadd.f32 %v256, 1.0
    %v265 = vrcp.pop %v257
    %v266 = vmul.f32 1.0, %v265
    %v267 = vrcp.pop %v258
    %v268 = vmul.f32 1.0, %v267
    %v269 = vrcp.pop %v259
    %v270 = vmul.f32 1.0, %v269
    %v271 = vrcp.pop %v260
    %v272 = vmul.f32 1.0, %v271
    %v273 = vrcp.pop %v261
    %v274 = vmul.f32 1.0, %v273
    %v275 = vrcp.pop %v262
    %v276 = vmul.f32 1.0, %v275
    %v277 = vrcp.pop %v263
    %v278 = vmul.f32 1.0, %v277
    %v279 = vrcp.pop %v264
    %v280 = vmul.f32 1.0, %v279
    %v281 = vmul.f32 %v225, %v266
    %v282 = vmul.f32 %v226, %v268
    %v283 = vmul.f32 %v227, %v270
    %v284 = vmul.f32 %v228, %v272
    %v285 = vmul.f32 %v229, %v274
    %v286 = vmul.f32 %v230, %v276
    %v287 = vmul.f32 %v231, %v278
    %v288 = vmul.f32 %v232, %v280
    %v289 = vld [vmem:[%s4] sm:$0x1]
    %v291 = vlaneseq
    %v292 = vshrl.u32 %v291, 7
    %v293 = vsub.s32 0, %v292
    %v294 = vrot.slane %v289, %v293
    %v296 = vmul.f32 %v281, %v294
    %v297 = vmul.f32 %v282, %v294
    %v298 = vmul.f32 %v283, %v294
    %v299 = vmul.f32 %v284, %v294
    %v300 = vmul.f32 %v285, %v294
    %v301 = vmul.f32 %v286, %v294
    %v302 = vmul.f32 %v287, %v294
    %v303 = vmul.f32 %v288, %v294
    %vm304 = vcmask 130048
    %v305 = vsel %vm304, %v296, 0.0
    %306 = vadd.xlane.f32.xlu0 %v305
    %v307 = vpop.xlane.xlu0 %306
    %v308 = vsel %vm304, %v297, 0.0
    %309 = vadd.xlane.f32.xlu0 %v308
    %v310 = vpop.xlane.xlu0 %309
    %v311 = vsel %vm304, %v298, 0.0
    %312 = vadd.xlane.f32.xlu0 %v311
    %v313 = vpop.xlane.xlu0 %312
    %v314 = vsel %vm304, %v299, 0.0
    %315 = vadd.xlane.f32.xlu0 %v314
    %v316 = vpop.xlane.xlu0 %315
    %v317 = vsel %vm304, %v300, 0.0
    %318 = vadd.xlane.f32.xlu0 %v317
    %v319 = vpop.xlane.xlu0 %318
    %v320 = vsel %vm304, %v301, 0.0
    %321 = vadd.xlane.f32.xlu0 %v320
    %v322 = vpop.xlane.xlu0 %321
    %v323 = vsel %vm304, %v302, 0.0
    %324 = vadd.xlane.f32.xlu0 %v323
    %v325 = vpop.xlane.xlu0 %324
    %v326 = vsel %vm304, %v303, 0.0
    %327 = vadd.xlane.f32.xlu0 %v326
    %v328 = vpop.xlane.xlu0 %327
    %v329 = vstv %s56
    %v330 = vadd.f32 %v307, %v329
    %v331 = vadd.f32 %v310, %v329
    %v332 = vadd.f32 %v313, %v329
    %v333 = vadd.f32 %v316, %v329
    %v334 = vadd.f32 %v319, %v329
    %v335 = vadd.f32 %v322, %v329
    %v336 = vadd.f32 %v325, %v329
    %v337 = vadd.f32 %v328, %v329
    %v346 = vlaneseq
    %v347 = vand.u32 %v346, 127
    %v348 = vlaneseq
    %v349 = vshrl.u32 %v348, 7
    %v350 = vsub.s32 %v347, %v349
    %v351 = vrot.slane %v330, %v350
    %v352 = vlaneseq
    %v353 = vshrl.u32 %v352, 7
    %v354 = vsub.s32 %v347, %v353
    %v355 = vrot.slane %v331, %v354
    %v356 = vlaneseq
    %v357 = vshrl.u32 %v356, 7
    %v358 = vsub.s32 %v347, %v357
    %v359 = vrot.slane %v332, %v358
    %v360 = vlaneseq
    %v361 = vshrl.u32 %v360, 7
    %v362 = vsub.s32 %v347, %v361
    %v363 = vrot.slane %v333, %v362
    %v364 = vlaneseq
    %v365 = vshrl.u32 %v364, 7
    %v366 = vsub.s32 %v347, %v365
    %v367 = vrot.slane %v334, %v366
    %v368 = vlaneseq
    %v369 = vshrl.u32 %v368, 7
    %v370 = vsub.s32 %v347, %v369
    %v371 = vrot.slane %v335, %v370
    %v372 = vlaneseq
    %v373 = vshrl.u32 %v372, 7
    %v374 = vsub.s32 %v347, %v373
    %v375 = vrot.slane %v336, %v374
    %v376 = vlaneseq
    %v377 = vshrl.u32 %v376, 7
    %v378 = vsub.s32 %v347, %v377
    %v379 = vrot.slane %v337, %v378
    %vm380 = vcmask 1041409
    %v381 = vsel %vm380, %v355, %v351
    %vm382 = vcmask 1042434
    %v383 = vsel %vm382, %v359, %v381
    %vm384 = vcmask 1043459
    %v385 = vsel %vm384, %v363, %v383
    %vm386 = vcmask 1044484
    %v387 = vsel %vm386, %v367, %v385
    %vm388 = vcmask 1045509
    %v389 = vsel %vm388, %v371, %v387
    %vm390 = vcmask 1046534
    %v391 = vsel %vm390, %v375, %v389
    %vm392 = vcmask 1047559
    %v393 = vsel %vm392, %v379, %v391
    %vm395 = vcmask 64512
    %396 = vst.msk [vmem:[#allocation2] sm:$0xff] %vm395, %v393
    %v397 = vld [vmem:[#allocation2] sm:$0xff]
    %v398 = vld [vmem:[%s1] sm:$0xf]
    %vm399 = vcmp.gt.bf16.partialorder %v398, 0
    %v400 = vsel %vm399, 65537, 0
    %v401 = vunpack.c.l.b16 %v400
    %vm402 = vcmp.ne.s32.totalorder %v401, 0
    %v403 = vsel %vm402, %v397, -1e+25
    %v404 = vsel %vm395, %v403, -inf
    %405 = vmax.xlane.f32.xlu0 %v404
    %v406 = vpop.xlane.xlu0 %405
    %v407 = vsub.f32 %v403, %v406
    %v408 = vmul.f32 %v407, 1.442695
    %v409 = vpow.pop %v408
    %v410 = vsel %vm395, %v409, 0.0
    %411 = vadd.xlane.f32.xlu0 %v410
    %v412 = vpop.xlane.xlu0 %411
    %v413 = vrcp.pop %v412
    %v414 = vmul.f32 %v409, %v413
    %415 = vxpose.xlu0.b32.start [1/16] %v414, 128
    %416 = vxpose.xlu0.b32.cont [2/16] 0.0, 128
    %417 = vxpose.xlu0.b32.cont [3/16] 0.0, 128
    %418 = vxpose.xlu0.b32.cont [4/16] 0.0, 128
    %419 = vxpose.xlu0.b32.cont [5/16] 0.0, 128
    %420 = vxpose.xlu0.b32.cont [6/16] 0.0, 128
    %421 = vxpose.xlu0.b32.cont [7/16] 0.0, 128
    %422 = vxpose.xlu0.b32.cont [8/16] 0.0, 128
    %423 = vxpose.xlu0.b32.cont [9/16] 0.0, 128
    %424 = vxpose.xlu0.b32.cont [10/16] 0.0, 128
    %425 = vxpose.xlu0.b32.cont [11/16] 0.0, 128
    %426 = vxpose.xlu0.b32.cont [12/16] 0.0, 128
    %427 = vxpose.xlu0.b32.cont [13/16] 0.0, 128
    %428 = vxpose.xlu0.b32.cont [14/16] 0.0, 128
    %429 = vxpose.xlu0.b32.cont [15/16] 0.0, 128
    %430 = vxpose.xlu0.b32.end [16/16] 0.0, 128
    %v431 = vpop.trf.xlu0
    %v432 = vpop.trf.xlu0
    %v433 = vpop.trf.xlu0
    %v434 = vpop.trf.xlu0
    %v435 = vpop.trf.xlu0
    %v436 = vpop.trf.xlu0
    %v437 = vpop.trf.xlu0
    %v438 = vpop.trf.xlu0
    %v439 = vpop.trf.xlu0
    %v440 = vpop.trf.xlu0
    %v441 = vpop.trf.xlu0
    %v442 = vpop.trf.xlu0
    %v443 = vpop.trf.xlu0
    %v444 = vpop.trf.xlu0
    %v445 = vpop.trf.xlu0
    %v446 = vpop.trf.xlu0
    %447 = vst.msk [vmem:[#allocation9] sm:$0xff] %vm395, %v431
    // Predicated region
    $region34: #{tpu_custom_call.1} parent=1 // pred_check
      _
    $region35: #{tpu_custom_call.1} parent=1 // pred_check_branch
      %449 = sbr.rel (0) target = $region37
    $region36: #{tpu_custom_call.1} parent=1 // pred_region
      %s451 = ssub.s32 128, 128
      %452 = vsyncadd [#allocation6], %s451
      %s454 = sshll.u32 [#allocation9], 4
      %s455 = int_to_ptr.vmem [resolvable:$true] %s454
      %457 = dma.vmem_to_hbm [thread:$0]  %s455, 128, %s6, [#allocation6]
    $region37: #{tpu_custom_call.1} parent=1 // pred_fallthru
      _
    // Predicated region
    $region38: #{tpu_custom_call.1} parent=1 // pred_check
      _
    $region39: #{tpu_custom_call.1} parent=1 // pred_check_branch
      %459 = sbr.rel (0) target = $region41
    $region40: #{tpu_custom_call.1} parent=1 // pred_region
      %460 = dma.done [#allocation6], 128
    $region41: #{tpu_custom_call.1} parent=1 // pred_fallthru
      _
    %461 = vsyncpa [#allocation5], 1
    %462 = vsyncpa [#allocation8], 1
    %463 = vsyncpa [#allocation6], 1

</llo_original>
